<compile_context>
chip_gen: v7x
topology: tpu7x:2x2x1
jax: 0.10.0
libtpu: 0.0.40
codegen_flags: <defaults>
</compile_context>

<pallas_src>
import numpy as np
import jax
import jax.numpy as jnp
from jax import lax
from jax.experimental import pallas as pl
from jax.experimental.pallas import tpu as pltpu


# ----------------------------- Pallas kernel --------------------------------
def lstm_head_kernel(xproj_ref,  # (T, B, 4H) f32  x @ W_ih^T + (b_ih+b_hh), gates (i,f,o,g)
                     mask_ref,   # (T, B, H)  f32  1.0 while t < length[b]
                     whh_ref,    # (H, 4H)    bf16 recurrent weights, gates (i,f,o,g)
                     wout_ref,   # (H, Opad)  f32  [out_link | out_direction | 0-pad]
                     bout_ref,   # (1, Opad)  f32
                     out_ref):   # (B, Opad)  f32  fused predictions
    T, B, _ = xproj_ref.shape
    H = whh_ref.shape[0]

    whh = whh_ref[...]                                   # (H, 4H) bf16, loaded once

    h = jnp.zeros((B, H), jnp.float32)
    c = jnp.zeros((B, H), jnp.float32)

    # T is a small compile-time constant: full unroll keeps (h, c) in registers and
    # lets the scheduler pipeline MXU / EUP / VPU work across steps.
    # TODO(synk): for larger T/B, switch to lax.fori_loop carries and drive the MXU
    # explicitly with W_hh stationary (pltpu.matmul_push_rhs / matmul_acc_lhs /
    # matmul_pop); also add a batch grid (dimension_semantics=("parallel",)) so
    # v7x's second TensorCore is used.
    for t in range(T):
        # bf16 MXU operands, f32 accumulation; x_proj already carries the hoisted
        # input projection + bias, so the serial chain is only this (B,H)x(H,4H).
        gates = xproj_ref[t] + jnp.dot(h.astype(jnp.bfloat16), whh,
                                       preferred_element_type=jnp.float32)  # (B, 4H)
        # gate order (i, f, o, g): one sigmoid over 3H lanes, one tanh over H lanes
        sig = jax.nn.sigmoid(gates[:, :3 * H])
        i_g = sig[:, 0 * H:1 * H]
        f_g = sig[:, 1 * H:2 * H]
        o_g = sig[:, 2 * H:3 * H]
        g_g = jnp.tanh(gates[:, 3 * H:])
        c_new = f_g * c + i_g * g_g
        h_new = o_g * jnp.tanh(c_new)
        # packed-sequence freeze: mask is pre-broadcast row-aligned with h/c, so
        # this is a plain (B, H) vreg load + vsel — no cross-lane work per step.
        m = mask_ref[t]
        h = jnp.where(m > 0.5, h_new, h)
        c = jnp.where(m > 0.5, c_new, c)

    # Fused, 128-lane-padded output heads: single MXU pass + single unmasked store.
    out_ref[...] = (jnp.dot(h, wout_ref[...], preferred_element_type=jnp.float32)
                    + bout_ref[...])


# ------------------------------- wrapper -------------------------------------
def _reorder_gates(w):
    """Permute PyTorch LSTM gate order (i, f, g, o) -> (i, f, o, g) along axis 0."""
    H = w.shape[0] // 4
    return jnp.concatenate([w[:2 * H], w[3 * H:4 * H], w[2 * H:3 * H]], axis=0)


@jax.jit
def rnn_forward_pallas(inputs, directions, lengths, params):
    """inputs/directions: (B, T) int32; lengths: (B,) int32."""
    B, T = inputs.shape
    H = params["w_hh"].shape[1]
    E = params["link_emb"].shape[1]

    # recurrent weights, gate-reordered to (i, f, o, g), bias pre-summed
    wih = _reorder_gates(params["w_ih"])                              # (4H, Din)
    whh_T = _reorder_gates(params["w_hh"]).T                          # (H, 4H)
    b = _reorder_gates(params["b_ih"] + params["b_hh"])               # (4H,)

    # ---- embedding fold: embs @ W_ih^T == link_table[inputs] + dir_table[dirs] ----
    # (padding_idx=0 rows are zero, so row 0 of each table is zero too)
    link_table = params["link_emb"] @ wih[:, :E].T                    # (NE+1, 4H)
    dir_table = params["dir_emb"] @ wih[:, E:].T                      # (DIR+1, 4H)
    x_proj = (jnp.take(link_table, inputs, axis=0)
              + jnp.take(dir_table, directions, axis=0) + b)          # (B, T, 4H)
    x_proj = jnp.transpose(x_proj, (1, 0, 2)).astype(jnp.float32)     # (T, B, 4H)

    # freeze mask, pre-broadcast to (T, B, H) (row-aligned with h/c in the kernel)
    valid = jnp.arange(T, dtype=jnp.int32)[:, None] < lengths[None, :]      # (T, B)
    mask = jnp.broadcast_to(valid[:, :, None], (T, B, H)).astype(jnp.float32)

    # fused output heads, zero-padded to a full 128-lane output
    n_link = params["w_link"].shape[0]
    n_dir = params["w_dir"].shape[0]
    O = n_link + n_dir
    O_pad = max(128, ((O + 127) // 128) * 128)
    wout = jnp.concatenate([params["w_link"].T, params["w_dir"].T], axis=1)  # (H, O)
    wout = jnp.pad(wout, ((0, 0), (0, O_pad - O))).astype(jnp.float32)       # (H, Opad)
    bout = jnp.pad(jnp.concatenate([params["b_link"], params["b_dir"]]),
                   (0, O_pad - O))[None, :].astype(jnp.float32)              # (1, Opad)

    vmem = pl.BlockSpec(memory_space=pltpu.MemorySpace.VMEM)
    fused = pl.pallas_call(
        lstm_head_kernel,
        out_shape=jax.ShapeDtypeStruct((B, O_pad), jnp.float32),
        in_specs=[vmem] * 5,
        out_specs=vmem,
    )(x_proj, mask, whh_T.astype(jnp.bfloat16), wout, bout)

    pred = fused[:, :n_link]
    pred_d = fused[:, n_link:O]
    return pred, pred_d


# --------------------------- pure-JAX reference ------------------------------
def rnn_forward_ref(inputs, directions, lengths, params):
    B, T = inputs.shape
    H = params["w_hh"].shape[1]
    link_embs = jnp.take(params["link_emb"], inputs, axis=0)
    dir_embs = jnp.take(params["dir_emb"], directions, axis=0)
    embs = jnp.concatenate([link_embs, dir_embs], axis=-1)
    b = params["b_ih"] + params["b_hh"]

    def step(carry, xt_mt):
        h, c = carry
        x_t, m_t = xt_mt
        gates = x_t @ params["w_ih"].T + h @ params["w_hh"].T + b
        i_g = jax.nn.sigmoid(gates[:, 0 * H:1 * H])
        f_g = jax.nn.sigmoid(gates[:, 1 * H:2 * H])
        g_g = jnp.tanh(gates[:, 2 * H:3 * H])
        o_g = jax.nn.sigmoid(gates[:, 3 * H:4 * H])
        c_new = f_g * c + i_g * g_g
        h_new = o_g * jnp.tanh(c_new)
        h = m_t * h_new + (1.0 - m_t) * h
        c = m_t * c_new + (1.0 - m_t) * c
        return (h, c), None

    embs_t = jnp.transpose(embs, (1, 0, 2))
    mask_t = (jnp.arange(T)[:, None] < lengths[None, :]).astype(jnp.float32)[..., None]
    (h, _), _ = lax.scan(step, (jnp.zeros((B, H)), jnp.zeros((B, H))),
                         (embs_t, mask_t))
    pred = h @ params["w_link"].T + params["b_link"]
    pred_d = h @ params["w_dir"].T + params["b_dir"]
    return pred, pred_d


# --------------------------------- main --------------------------------------
if __name__ == "__main__":
    # small, forward-consistent hyper-params
    B, T = 8, 8                 # batch_size, observed sequence length
    EDGE_DIM, DIR_DIM = 16, 16  # edge_dim, direction_dim
    DIN = EDGE_DIM + DIR_DIM
    H = 32                      # hidden_dim
    NUM_EDGES, DIRECTION, PRE_LEN = 16, 4, 4

    key = jax.random.PRNGKey(0)
    ks = jax.random.split(key, 12)

    def unif(k, shape, scale):
        return jax.random.uniform(k, shape, jnp.float32, -scale, scale)

    s_h = 1.0 / np.sqrt(H)
    params = {
        # nn.Embedding(num_edges+1, edge_dim, padding_idx=0): row 0 zeroed
        "link_emb": jax.random.normal(ks[0], (NUM_EDGES + 1, EDGE_DIM),
                                      jnp.float32).at[0].set(0.0),
        "dir_emb": jax.random.normal(ks[1], (DIRECTION + 1, DIR_DIM),
                                     jnp.float32).at[0].set(0.0),
        # nn.LSTM(input=DIN, hidden=H, 1 layer); canonical gate order i,f,g,o
        "w_ih": unif(ks[2], (4 * H, DIN), s_h),
        "w_hh": unif(ks[3], (4 * H, H), s_h),
        "b_ih": unif(ks[4], (4 * H,), s_h),
        "b_hh": unif(ks[5], (4 * H,), s_h),
        # nn.Linear(H, num_edges*pre_len) / nn.Linear(H, direction*pre_len)
        "w_link": unif(ks[6], (NUM_EDGES * PRE_LEN, H), s_h),
        "b_link": unif(ks[7], (NUM_EDGES * PRE_LEN,), s_h),
        "w_dir": unif(ks[8], (DIRECTION * PRE_LEN, H), s_h),
        "b_dir": unif(ks[9], (DIRECTION * PRE_LEN,), s_h),
    }

    # example inputs: edge ids, direction ids, per-sequence valid lengths (mask)
    inputs = jax.random.randint(ks[10], (B, T), 1, NUM_EDGES + 1, jnp.int32)
    directions = jax.random.randint(ks[11], (B, T), 1, DIRECTION + 1, jnp.int32)
    lengths = jnp.array([T, T - 1, T - 2, T, 3, T - 3, 5, T], dtype=jnp.int32)

    pred, pred_d = rnn_forward_pallas(inputs, directions, lengths, params)
    jax.block_until_ready((pred, pred_d))

    pred_ref, pred_d_ref = rnn_forward_ref(inputs, directions, lengths, params)
    # tolerance relaxed vs the f32 reference because the recurrent matmul feeds the
    # MXU bf16 operands (f32 accumulation) per the performance review.
    np.testing.assert_allclose(np.asarray(pred), np.asarray(pred_ref),
                               rtol=5e-3, atol=5e-3)
    np.testing.assert_allclose(np.asarray(pred_d), np.asarray(pred_d_ref),
                               rtol=5e-3, atol=5e-3)

    assert pred.shape == (B, NUM_EDGES * PRE_LEN)
    assert pred_d.shape == (B, DIRECTION * PRE_LEN)
    print("KERNEL_OK")
</pallas_src>

<mosaic_0001>
module attributes {stable_mosaic.version = 11 : i64} {
  func.func @lstm_head_kernel(%arg0: memref<8x8x128xf32, #tpu.memory_space<vmem>>, %arg1: memref<8x8x32xf32, #tpu.memory_space<vmem>>, %arg2: memref<32x128xbf16, #tpu.memory_space<vmem>>, %arg3: memref<32x128xf32, #tpu.memory_space<vmem>>, %arg4: memref<1x128xf32, #tpu.memory_space<vmem>>, %arg5: memref<8x128xf32, #tpu.memory_space<vmem>>) attributes {dimension_semantics = [], scalar_prefetch = 0 : i64, scratch_operands = 0 : i64, tpu.core_type = #tpu.core_type<tc>} {
    %c0 = arith.constant 0 : index
    %c0_0 = arith.constant 0 : index
    %0 = vector.load %arg2[%c0, %c0_0] : memref<32x128xbf16, #tpu.memory_space<vmem>>, vector<32x128xbf16>
    %cst = arith.constant 0.000000e+00 : f32
    %1 = vector.broadcast %cst : f32 to vector<8x32xf32>
    %cst_1 = arith.constant 0.000000e+00 : f32
    %2 = vector.broadcast %cst_1 : f32 to vector<8x32xf32>
    %c0_2 = arith.constant 0 : index
    %c0_3 = arith.constant 0 : index
    %c0_4 = arith.constant 0 : index
    %3 = vector.load %arg0[%c0_2, %c0_3, %c0_4] : memref<8x8x128xf32, #tpu.memory_space<vmem>>, vector<1x8x128xf32>
    %4 = vector.shape_cast %3 : vector<1x8x128xf32> to vector<8x128xf32>
    %5 = arith.truncf %1 : vector<8x32xf32> to vector<8x32xbf16>
    %cst_5 = arith.constant dense<0.000000e+00> : vector<8x128xf32>
    %6 = tpu.matmul %5, %0, %cst_5 {dimension_numbers = #tpu.dot_dimension_numbers<[1], [0], [0], [1], [0, 0, 1, 1], [], []>} : vector<8x32xbf16>, vector<32x128xbf16>, vector<8x128xf32> -> vector<8x128xf32>
    %7 = arith.addf %4, %6 : vector<8x128xf32>
    %8 = vector.extract_strided_slice %7 {offsets = [0, 0], sizes = [8, 96], strides = [1, 1]} : vector<8x128xf32> to vector<8x96xf32>
    %9 = arith.negf %8 : vector<8x96xf32>
    %10 = math.exp %9 : vector<8x96xf32>
    %cst_6 = arith.constant 1.000000e+00 : f32
    %11 = vector.broadcast %cst_6 : f32 to vector<8x96xf32>
    %12 = arith.addf %11, %10 : vector<8x96xf32>
    %13 = arith.divf %11, %12 : vector<8x96xf32>
    %14 = vector.extract_strided_slice %13 {offsets = [0, 0], sizes = [8, 32], strides = [1, 1]} : vector<8x96xf32> to vector<8x32xf32>
    %15 = vector.extract_strided_slice %13 {offsets = [0, 32], sizes = [8, 32], strides = [1, 1]} : vector<8x96xf32> to vector<8x32xf32>
    %16 = vector.extract_strided_slice %13 {offsets = [0, 64], sizes = [8, 32], strides = [1, 1]} : vector<8x96xf32> to vector<8x32xf32>
    %17 = vector.extract_strided_slice %7 {offsets = [0, 96], sizes = [8, 32], strides = [1, 1]} : vector<8x128xf32> to vector<8x32xf32>
    %18 = math.tanh %17 : vector<8x32xf32>
    %19 = arith.mulf %15, %2 : vector<8x32xf32>
    %20 = arith.mulf %14, %18 : vector<8x32xf32>
    %21 = arith.addf %19, %20 : vector<8x32xf32>
    %22 = math.tanh %21 : vector<8x32xf32>
    %23 = arith.mulf %16, %22 : vector<8x32xf32>
    %c0_7 = arith.constant 0 : index
    %c0_8 = arith.constant 0 : index
    %c0_9 = arith.constant 0 : index
    %24 = vector.load %arg1[%c0_7, %c0_8, %c0_9] : memref<8x8x32xf32, #tpu.memory_space<vmem>>, vector<1x8x32xf32>
    %25 = vector.shape_cast %24 : vector<1x8x32xf32> to vector<8x32xf32>
    %cst_10 = arith.constant 5.000000e-01 : f32
    %26 = vector.broadcast %cst_10 : f32 to vector<8x32xf32>
    %27 = arith.cmpf ogt, %25, %26 : vector<8x32xf32>
    %28 = arith.select %27, %23, %1 : vector<8x32xi1>, vector<8x32xf32>
    %cst_11 = arith.constant 5.000000e-01 : f32
    %29 = vector.broadcast %cst_11 : f32 to vector<8x32xf32>
    %30 = arith.cmpf ogt, %25, %29 : vector<8x32xf32>
    %31 = arith.select %30, %21, %2 : vector<8x32xi1>, vector<8x32xf32>
    %c1 = arith.constant 1 : index
    %c0_12 = arith.constant 0 : index
    %c0_13 = arith.constant 0 : index
    %32 = vector.load %arg0[%c1, %c0_12, %c0_13] : memref<8x8x128xf32, #tpu.memory_space<vmem>>, vector<1x8x128xf32>
    %33 = vector.shape_cast %32 : vector<1x8x128xf32> to vector<8x128xf32>
    %34 = arith.truncf %28 : vector<8x32xf32> to vector<8x32xbf16>
    %cst_14 = arith.constant dense<0.000000e+00> : vector<8x128xf32>
    %35 = tpu.matmul %34, %0, %cst_14 {dimension_numbers = #tpu.dot_dimension_numbers<[1], [0], [0], [1], [0, 0, 1, 1], [], []>} : vector<8x32xbf16>, vector<32x128xbf16>, vector<8x128xf32> -> vector<8x128xf32>
    %36 = arith.addf %33, %35 : vector<8x128xf32>
    %37 = vector.extract_strided_slice %36 {offsets = [0, 0], sizes = [8, 96], strides = [1, 1]} : vector<8x128xf32> to vector<8x96xf32>
    %38 = arith.negf %37 : vector<8x96xf32>
    %39 = math.exp %38 : vector<8x96xf32>
    %cst_15 = arith.constant 1.000000e+00 : f32
    %40 = vector.broadcast %cst_15 : f32 to vector<8x96xf32>
    %41 = arith.addf %40, %39 : vector<8x96xf32>
    %42 = arith.divf %40, %41 : vector<8x96xf32>
    %43 = vector.extract_strided_slice %42 {offsets = [0, 0], sizes = [8, 32], strides = [1, 1]} : vector<8x96xf32> to vector<8x32xf32>
    %44 = vector.extract_strided_slice %42 {offsets = [0, 32], sizes = [8, 32], strides = [1, 1]} : vector<8x96xf32> to vector<8x32xf32>
    %45 = vector.extract_strided_slice %42 {offsets = [0, 64], sizes = [8, 32], strides = [1, 1]} : vector<8x96xf32> to vector<8x32xf32>
    %46 = vector.extract_strided_slice %36 {offsets = [0, 96], sizes = [8, 32], strides = [1, 1]} : vector<8x128xf32> to vector<8x32xf32>
    %47 = math.tanh %46 : vector<8x32xf32>
    %48 = arith.mulf %44, %31 : vector<8x32xf32>
    %49 = arith.mulf %43, %47 : vector<8x32xf32>
    %50 = arith.addf %48, %49 : vector<8x32xf32>
    %51 = math.tanh %50 : vector<8x32xf32>
    %52 = arith.mulf %45, %51 : vector<8x32xf32>
    %c1_16 = arith.constant 1 : index
    %c0_17 = arith.constant 0 : index
    %c0_18 = arith.constant 0 : index
    %53 = vector.load %arg1[%c1_16, %c0_17, %c0_18] : memref<8x8x32xf32, #tpu.memory_space<vmem>>, vector<1x8x32xf32>
    %54 = vector.shape_cast %53 : vector<1x8x32xf32> to vector<8x32xf32>
    %cst_19 = arith.constant 5.000000e-01 : f32
    %55 = vector.broadcast %cst_19 : f32 to vector<8x32xf32>
    %56 = arith.cmpf ogt, %54, %55 : vector<8x32xf32>
    %57 = arith.select %56, %52, %28 : vector<8x32xi1>, vector<8x32xf32>
    %cst_20 = arith.constant 5.000000e-01 : f32
    %58 = vector.broadcast %cst_20 : f32 to vector<8x32xf32>
    %59 = arith.cmpf ogt, %54, %58 : vector<8x32xf32>
    %60 = arith.select %59, %50, %31 : vector<8x32xi1>, vector<8x32xf32>
    %c2 = arith.constant 2 : index
    %c0_21 = arith.constant 0 : index
    %c0_22 = arith.constant 0 : index
    %61 = vector.load %arg0[%c2, %c0_21, %c0_22] : memref<8x8x128xf32, #tpu.memory_space<vmem>>, vector<1x8x128xf32>
    %62 = vector.shape_cast %61 : vector<1x8x128xf32> to vector<8x128xf32>
    %63 = arith.truncf %57 : vector<8x32xf32> to vector<8x32xbf16>
    %cst_23 = arith.constant dense<0.000000e+00> : vector<8x128xf32>
    %64 = tpu.matmul %63, %0, %cst_23 {dimension_numbers = #tpu.dot_dimension_numbers<[1], [0], [0], [1], [0, 0, 1, 1], [], []>} : vector<8x32xbf16>, vector<32x128xbf16>, vector<8x128xf32> -> vector<8x128xf32>
    %65 = arith.addf %62, %64 : vector<8x128xf32>
    %66 = vector.extract_strided_slice %65 {offsets = [0, 0], sizes = [8, 96], strides = [1, 1]} : vector<8x128xf32> to vector<8x96xf32>
    %67 = arith.negf %66 : vector<8x96xf32>
    %68 = math.exp %67 : vector<8x96xf32>
    %cst_24 = arith.constant 1.000000e+00 : f32
    %69 = vector.broadcast %cst_24 : f32 to vector<8x96xf32>
    %70 = arith.addf %69, %68 : vector<8x96xf32>
    %71 = arith.divf %69, %70 : vector<8x96xf32>
    %72 = vector.extract_strided_slice %71 {offsets = [0, 0], sizes = [8, 32], strides = [1, 1]} : vector<8x96xf32> to vector<8x32xf32>
    %73 = vector.extract_strided_slice %71 {offsets = [0, 32], sizes = [8, 32], strides = [1, 1]} : vector<8x96xf32> to vector<8x32xf32>
    %74 = vector.extract_strided_slice %71 {offsets = [0, 64], sizes = [8, 32], strides = [1, 1]} : vector<8x96xf32> to vector<8x32xf32>
    %75 = vector.extract_strided_slice %65 {offsets = [0, 96], sizes = [8, 32], strides = [1, 1]} : vector<8x128xf32> to vector<8x32xf32>
    %76 = math.tanh %75 : vector<8x32xf32>
    %77 = arith.mulf %73, %60 : vector<8x32xf32>
    %78 = arith.mulf %72, %76 : vector<8x32xf32>
    %79 = arith.addf %77, %78 : vector<8x32xf32>
    %80 = math.tanh %79 : vector<8x32xf32>
    %81 = arith.mulf %74, %80 : vector<8x32xf32>
    %c2_25 = arith.constant 2 : index
    %c0_26 = arith.constant 0 : index
    %c0_27 = arith.constant 0 : index
    %82 = vector.load %arg1[%c2_25, %c0_26, %c0_27] : memref<8x8x32xf32, #tpu.memory_space<vmem>>, vector<1x8x32xf32>
    %83 = vector.shape_cast %82 : vector<1x8x32xf32> to vector<8x32xf32>
    %cst_28 = arith.constant 5.000000e-01 : f32
    %84 = vector.broadcast %cst_28 : f32 to vector<8x32xf32>
    %85 = arith.cmpf ogt, %83, %84 : vector<8x32xf32>
    %86 = arith.select %85, %81, %57 : vector<8x32xi1>, vector<8x32xf32>
    %cst_29 = arith.constant 5.000000e-01 : f32
    %87 = vector.broadcast %cst_29 : f32 to vector<8x32xf32>
    %88 = arith.cmpf ogt, %83, %87 : vector<8x32xf32>
    %89 = arith.select %88, %79, %60 : vector<8x32xi1>, vector<8x32xf32>
    %c3 = arith.constant 3 : index
    %c0_30 = arith.constant 0 : index
    %c0_31 = arith.constant 0 : index
    %90 = vector.load %arg0[%c3, %c0_30, %c0_31] : memref<8x8x128xf32, #tpu.memory_space<vmem>>, vector<1x8x128xf32>
    %91 = vector.shape_cast %90 : vector<1x8x128xf32> to vector<8x128xf32>
    %92 = arith.truncf %86 : vector<8x32xf32> to vector<8x32xbf16>
    %cst_32 = arith.constant dense<0.000000e+00> : vector<8x128xf32>
    %93 = tpu.matmul %92, %0, %cst_32 {dimension_numbers = #tpu.dot_dimension_numbers<[1], [0], [0], [1], [0, 0, 1, 1], [], []>} : vector<8x32xbf16>, vector<32x128xbf16>, vector<8x128xf32> -> vector<8x128xf32>
    %94 = arith.addf %91, %93 : vector<8x128xf32>
    %95 = vector.extract_strided_slice %94 {offsets = [0, 0], sizes = [8, 96], strides = [1, 1]} : vector<8x128xf32> to vector<8x96xf32>
    %96 = arith.negf %95 : vector<8x96xf32>
    %97 = math.exp %96 : vector<8x96xf32>
    %cst_33 = arith.constant 1.000000e+00 : f32
    %98 = vector.broadcast %cst_33 : f32 to vector<8x96xf32>
    %99 = arith.addf %98, %97 : vector<8x96xf32>
    %100 = arith.divf %98, %99 : vector<8x96xf32>
    %101 = vector.extract_strided_slice %100 {offsets = [0, 0], sizes = [8, 32], strides = [1, 1]} : vector<8x96xf32> to vector<8x32xf32>
    %102 = vector.extract_strided_slice %100 {offsets = [0, 32], sizes = [8, 32], strides = [1, 1]} : vector<8x96xf32> to vector<8x32xf32>
    %103 = vector.extract_strided_slice %100 {offsets = [0, 64], sizes = [8, 32], strides = [1, 1]} : vector<8x96xf32> to vector<8x32xf32>
    %104 = vector.extract_strided_slice %94 {offsets = [0, 96], sizes = [8, 32], strides = [1, 1]} : vector<8x128xf32> to vector<8x32xf32>
    %105 = math.tanh %104 : vector<8x32xf32>
    %106 = arith.mulf %102, %89 : vector<8x32xf32>
    %107 = arith.mulf %101, %105 : vector<8x32xf32>
    %108 = arith.addf %106, %107 : vector<8x32xf32>
    %109 = math.tanh %108 : vector<8x32xf32>
    %110 = arith.mulf %103, %109 : vector<8x32xf32>
    %c3_34 = arith.constant 3 : index
    %c0_35 = arith.constant 0 : index
    %c0_36 = arith.constant 0 : index
    %111 = vector.load %arg1[%c3_34, %c0_35, %c0_36] : memref<8x8x32xf32, #tpu.memory_space<vmem>>, vector<1x8x32xf32>
    %112 = vector.shape_cast %111 : vector<1x8x32xf32> to vector<8x32xf32>
    %cst_37 = arith.constant 5.000000e-01 : f32
    %113 = vector.broadcast %cst_37 : f32 to vector<8x32xf32>
    %114 = arith.cmpf ogt, %112, %113 : vector<8x32xf32>
    %115 = arith.select %114, %110, %86 : vector<8x32xi1>, vector<8x32xf32>
    %cst_38 = arith.constant 5.000000e-01 : f32
    %116 = vector.broadcast %cst_38 : f32 to vector<8x32xf32>
    %117 = arith.cmpf ogt, %112, %116 : vector<8x32xf32>
    %118 = arith.select %117, %108, %89 : vector<8x32xi1>, vector<8x32xf32>
    %c4 = arith.constant 4 : index
    %c0_39 = arith.constant 0 : index
    %c0_40 = arith.constant 0 : index
    %119 = vector.load %arg0[%c4, %c0_39, %c0_40] : memref<8x8x128xf32, #tpu.memory_space<vmem>>, vector<1x8x128xf32>
    %120 = vector.shape_cast %119 : vector<1x8x128xf32> to vector<8x128xf32>
    %121 = arith.truncf %115 : vector<8x32xf32> to vector<8x32xbf16>
    %cst_41 = arith.constant dense<0.000000e+00> : vector<8x128xf32>
    %122 = tpu.matmul %121, %0, %cst_41 {dimension_numbers = #tpu.dot_dimension_numbers<[1], [0], [0], [1], [0, 0, 1, 1], [], []>} : vector<8x32xbf16>, vector<32x128xbf16>, vector<8x128xf32> -> vector<8x128xf32>
    %123 = arith.addf %120, %122 : vector<8x128xf32>
    %124 = vector.extract_strided_slice %123 {offsets = [0, 0], sizes = [8, 96], strides = [1, 1]} : vector<8x128xf32> to vector<8x96xf32>
    %125 = arith.negf %124 : vector<8x96xf32>
    %126 = math.exp %125 : vector<8x96xf32>
    %cst_42 = arith.constant 1.000000e+00 : f32
    %127 = vector.broadcast %cst_42 : f32 to vector<8x96xf32>
    %128 = arith.addf %127, %126 : vector<8x96xf32>
    %129 = arith.divf %127, %128 : vector<8x96xf32>
    %130 = vector.extract_strided_slice %129 {offsets = [0, 0], sizes = [8, 32], strides = [1, 1]} : vector<8x96xf32> to vector<8x32xf32>
    %131 = vector.extract_strided_slice %129 {offsets = [0, 32], sizes = [8, 32], strides = [1, 1]} : vector<8x96xf32> to vector<8x32xf32>
    %132 = vector.extract_strided_slice %129 {offsets = [0, 64], sizes = [8, 32], strides = [1, 1]} : vector<8x96xf32> to vector<8x32xf32>
    %133 = vector.extract_strided_slice %123 {offsets = [0, 96], sizes = [8, 32], strides = [1, 1]} : vector<8x128xf32> to vector<8x32xf32>
    %134 = math.tanh %133 : vector<8x32xf32>
    %135 = arith.mulf %131, %118 : vector<8x32xf32>
    %136 = arith.mulf %130, %134 : vector<8x32xf32>
    %137 = arith.addf %135, %136 : vector<8x32xf32>
    %138 = math.tanh %137 : vector<8x32xf32>
    %139 = arith.mulf %132, %138 : vector<8x32xf32>
    %c4_43 = arith.constant 4 : index
    %c0_44 = arith.constant 0 : index
    %c0_45 = arith.constant 0 : index
    %140 = vector.load %arg1[%c4_43, %c0_44, %c0_45] : memref<8x8x32xf32, #tpu.memory_space<vmem>>, vector<1x8x32xf32>
    %141 = vector.shape_cast %140 : vector<1x8x32xf32> to vector<8x32xf32>
    %cst_46 = arith.constant 5.000000e-01 : f32
    %142 = vector.broadcast %cst_46 : f32 to vector<8x32xf32>
    %143 = arith.cmpf ogt, %141, %142 : vector<8x32xf32>
    %144 = arith.select %143, %139, %115 : vector<8x32xi1>, vector<8x32xf32>
    %cst_47 = arith.constant 5.000000e-01 : f32
    %145 = vector.broadcast %cst_47 : f32 to vector<8x32xf32>
    %146 = arith.cmpf ogt, %141, %145 : vector<8x32xf32>
    %147 = arith.select %146, %137, %118 : vector<8x32xi1>, vector<8x32xf32>
    %c5 = arith.constant 5 : index
    %c0_48 = arith.constant 0 : index
    %c0_49 = arith.constant 0 : index
    %148 = vector.load %arg0[%c5, %c0_48, %c0_49] : memref<8x8x128xf32, #tpu.memory_space<vmem>>, vector<1x8x128xf32>
    %149 = vector.shape_cast %148 : vector<1x8x128xf32> to vector<8x128xf32>
    %150 = arith.truncf %144 : vector<8x32xf32> to vector<8x32xbf16>
    %cst_50 = arith.constant dense<0.000000e+00> : vector<8x128xf32>
    %151 = tpu.matmul %150, %0, %cst_50 {dimension_numbers = #tpu.dot_dimension_numbers<[1], [0], [0], [1], [0, 0, 1, 1], [], []>} : vector<8x32xbf16>, vector<32x128xbf16>, vector<8x128xf32> -> vector<8x128xf32>
    %152 = arith.addf %149, %151 : vector<8x128xf32>
    %153 = vector.extract_strided_slice %152 {offsets = [0, 0], sizes = [8, 96], strides = [1, 1]} : vector<8x128xf32> to vector<8x96xf32>
    %154 = arith.negf %153 : vector<8x96xf32>
    %155 = math.exp %154 : vector<8x96xf32>
    %cst_51 = arith.constant 1.000000e+00 : f32
    %156 = vector.broadcast %cst_51 : f32 to vector<8x96xf32>
    %157 = arith.addf %156, %155 : vector<8x96xf32>
    %158 = arith.divf %156, %157 : vector<8x96xf32>
    %159 = vector.extract_strided_slice %158 {offsets = [0, 0], sizes = [8, 32], strides = [1, 1]} : vector<8x96xf32> to vector<8x32xf32>
    %160 = vector.extract_strided_slice %158 {offsets = [0, 32], sizes = [8, 32], strides = [1, 1]} : vector<8x96xf32> to vector<8x32xf32>
    %161 = vector.extract_strided_slice %158 {offsets = [0, 64], sizes = [8, 32], strides = [1, 1]} : vector<8x96xf32> to vector<8x32xf32>
    %162 = vector.extract_strided_slice %152 {offsets = [0, 96], sizes = [8, 32], strides = [1, 1]} : vector<8x128xf32> to vector<8x32xf32>
    %163 = math.tanh %162 : vector<8x32xf32>
    %164 = arith.mulf %160, %147 : vector<8x32xf32>
    %165 = arith.mulf %159, %163 : vector<8x32xf32>
    %166 = arith.addf %164, %165 : vector<8x32xf32>
    %167 = math.tanh %166 : vector<8x32xf32>
    %168 = arith.mulf %161, %167 : vector<8x32xf32>
    %c5_52 = arith.constant 5 : index
    %c0_53 = arith.constant 0 : index
    %c0_54 = arith.constant 0 : index
    %169 = vector.load %arg1[%c5_52, %c0_53, %c0_54] : memref<8x8x32xf32, #tpu.memory_space<vmem>>, vector<1x8x32xf32>
    %170 = vector.shape_cast %169 : vector<1x8x32xf32> to vector<8x32xf32>
    %cst_55 = arith.constant 5.000000e-01 : f32
    %171 = vector.broadcast %cst_55 : f32 to vector<8x32xf32>
    %172 = arith.cmpf ogt, %170, %171 : vector<8x32xf32>
    %173 = arith.select %172, %168, %144 : vector<8x32xi1>, vector<8x32xf32>
    %cst_56 = arith.constant 5.000000e-01 : f32
    %174 = vector.broadcast %cst_56 : f32 to vector<8x32xf32>
    %175 = arith.cmpf ogt, %170, %174 : vector<8x32xf32>
    %176 = arith.select %175, %166, %147 : vector<8x32xi1>, vector<8x32xf32>
    %c6 = arith.constant 6 : index
    %c0_57 = arith.constant 0 : index
    %c0_58 = arith.constant 0 : index
    %177 = vector.load %arg0[%c6, %c0_57, %c0_58] : memref<8x8x128xf32, #tpu.memory_space<vmem>>, vector<1x8x128xf32>
    %178 = vector.shape_cast %177 : vector<1x8x128xf32> to vector<8x128xf32>
    %179 = arith.truncf %173 : vector<8x32xf32> to vector<8x32xbf16>
    %cst_59 = arith.constant dense<0.000000e+00> : vector<8x128xf32>
    %180 = tpu.matmul %179, %0, %cst_59 {dimension_numbers = #tpu.dot_dimension_numbers<[1], [0], [0], [1], [0, 0, 1, 1], [], []>} : vector<8x32xbf16>, vector<32x128xbf16>, vector<8x128xf32> -> vector<8x128xf32>
    %181 = arith.addf %178, %180 : vector<8x128xf32>
    %182 = vector.extract_strided_slice %181 {offsets = [0, 0], sizes = [8, 96], strides = [1, 1]} : vector<8x128xf32> to vector<8x96xf32>
    %183 = arith.negf %182 : vector<8x96xf32>
    %184 = math.exp %183 : vector<8x96xf32>
    %cst_60 = arith.constant 1.000000e+00 : f32
    %185 = vector.broadcast %cst_60 : f32 to vector<8x96xf32>
    %186 = arith.addf %185, %184 : vector<8x96xf32>
    %187 = arith.divf %185, %186 : vector<8x96xf32>
    %188 = vector.extract_strided_slice %187 {offsets = [0, 0], sizes = [8, 32], strides = [1, 1]} : vector<8x96xf32> to vector<8x32xf32>
    %189 = vector.extract_strided_slice %187 {offsets = [0, 32], sizes = [8, 32], strides = [1, 1]} : vector<8x96xf32> to vector<8x32xf32>
    %190 = vector.extract_strided_slice %187 {offsets = [0, 64], sizes = [8, 32], strides = [1, 1]} : vector<8x96xf32> to vector<8x32xf32>
    %191 = vector.extract_strided_slice %181 {offsets = [0, 96], sizes = [8, 32], strides = [1, 1]} : vector<8x128xf32> to vector<8x32xf32>
    %192 = math.tanh %191 : vector<8x32xf32>
    %193 = arith.mulf %189, %176 : vector<8x32xf32>
    %194 = arith.mulf %188, %192 : vector<8x32xf32>
    %195 = arith.addf %193, %194 : vector<8x32xf32>
    %196 = math.tanh %195 : vector<8x32xf32>
    %197 = arith.mulf %190, %196 : vector<8x32xf32>
    %c6_61 = arith.constant 6 : index
    %c0_62 = arith.constant 0 : index
    %c0_63 = arith.constant 0 : index
    %198 = vector.load %arg1[%c6_61, %c0_62, %c0_63] : memref<8x8x32xf32, #tpu.memory_space<vmem>>, vector<1x8x32xf32>
    %199 = vector.shape_cast %198 : vector<1x8x32xf32> to vector<8x32xf32>
    %cst_64 = arith.constant 5.000000e-01 : f32
    %200 = vector.broadcast %cst_64 : f32 to vector<8x32xf32>
    %201 = arith.cmpf ogt, %199, %200 : vector<8x32xf32>
    %202 = arith.select %201, %197, %173 : vector<8x32xi1>, vector<8x32xf32>
    %cst_65 = arith.constant 5.000000e-01 : f32
    %203 = vector.broadcast %cst_65 : f32 to vector<8x32xf32>
    %204 = arith.cmpf ogt, %199, %203 : vector<8x32xf32>
    %205 = arith.select %204, %195, %176 : vector<8x32xi1>, vector<8x32xf32>
    %c7 = arith.constant 7 : index
    %c0_66 = arith.constant 0 : index
    %c0_67 = arith.constant 0 : index
    %206 = vector.load %arg0[%c7, %c0_66, %c0_67] : memref<8x8x128xf32, #tpu.memory_space<vmem>>, vector<1x8x128xf32>
    %207 = vector.shape_cast %206 : vector<1x8x128xf32> to vector<8x128xf32>
    %208 = arith.truncf %202 : vector<8x32xf32> to vector<8x32xbf16>
    %cst_68 = arith.constant dense<0.000000e+00> : vector<8x128xf32>
    %209 = tpu.matmul %208, %0, %cst_68 {dimension_numbers = #tpu.dot_dimension_numbers<[1], [0], [0], [1], [0, 0, 1, 1], [], []>} : vector<8x32xbf16>, vector<32x128xbf16>, vector<8x128xf32> -> vector<8x128xf32>
    %210 = arith.addf %207, %209 : vector<8x128xf32>
    %211 = vector.extract_strided_slice %210 {offsets = [0, 0], sizes = [8, 96], strides = [1, 1]} : vector<8x128xf32> to vector<8x96xf32>
    %212 = arith.negf %211 : vector<8x96xf32>
    %213 = math.exp %212 : vector<8x96xf32>
    %cst_69 = arith.constant 1.000000e+00 : f32
    %214 = vector.broadcast %cst_69 : f32 to vector<8x96xf32>
    %215 = arith.addf %214, %213 : vector<8x96xf32>
    %216 = arith.divf %214, %215 : vector<8x96xf32>
    %217 = vector.extract_strided_slice %216 {offsets = [0, 0], sizes = [8, 32], strides = [1, 1]} : vector<8x96xf32> to vector<8x32xf32>
    %218 = vector.extract_strided_slice %216 {offsets = [0, 32], sizes = [8, 32], strides = [1, 1]} : vector<8x96xf32> to vector<8x32xf32>
    %219 = vector.extract_strided_slice %216 {offsets = [0, 64], sizes = [8, 32], strides = [1, 1]} : vector<8x96xf32> to vector<8x32xf32>
    %220 = vector.extract_strided_slice %210 {offsets = [0, 96], sizes = [8, 32], strides = [1, 1]} : vector<8x128xf32> to vector<8x32xf32>
    %221 = math.tanh %220 : vector<8x32xf32>
    %222 = arith.mulf %218, %205 : vector<8x32xf32>
    %223 = arith.mulf %217, %221 : vector<8x32xf32>
    %224 = arith.addf %222, %223 : vector<8x32xf32>
    %225 = math.tanh %224 : vector<8x32xf32>
    %226 = arith.mulf %219, %225 : vector<8x32xf32>
    %c7_70 = arith.constant 7 : index
    %c0_71 = arith.constant 0 : index
    %c0_72 = arith.constant 0 : index
    %227 = vector.load %arg1[%c7_70, %c0_71, %c0_72] : memref<8x8x32xf32, #tpu.memory_space<vmem>>, vector<1x8x32xf32>
    %228 = vector.shape_cast %227 : vector<1x8x32xf32> to vector<8x32xf32>
    %cst_73 = arith.constant 5.000000e-01 : f32
    %229 = vector.broadcast %cst_73 : f32 to vector<8x32xf32>
    %230 = arith.cmpf ogt, %228, %229 : vector<8x32xf32>
    %231 = arith.select %230, %226, %202 : vector<8x32xi1>, vector<8x32xf32>
    %c0_74 = arith.constant 0 : index
    %c0_75 = arith.constant 0 : index
    %232 = vector.load %arg3[%c0_74, %c0_75] : memref<32x128xf32, #tpu.memory_space<vmem>>, vector<32x128xf32>
    %cst_76 = arith.constant dense<0.000000e+00> : vector<8x128xf32>
    %233 = tpu.matmul %231, %232, %cst_76 {dimension_numbers = #tpu.dot_dimension_numbers<[1], [0], [0], [1], [0, 0, 1, 1], [], []>} : vector<8x32xf32>, vector<32x128xf32>, vector<8x128xf32> -> vector<8x128xf32>
    %c0_77 = arith.constant 0 : index
    %c0_78 = arith.constant 0 : index
    %234 = vector.load %arg4[%c0_77, %c0_78] : memref<1x128xf32, #tpu.memory_space<vmem>>, vector<1x128xf32>
    %235 = vector.broadcast %234 : vector<1x128xf32> to vector<8x128xf32>
    %236 = arith.addf %233, %235 : vector<8x128xf32>
    %c0_79 = arith.constant 0 : index
    %c0_80 = arith.constant 0 : index
    %237 = vector.load %arg5[%c0_79, %c0_80] : memref<8x128xf32, #tpu.memory_space<vmem>>, vector<8x128xf32>
    tpu.vector_store %arg5[%c0_79, %c0_80], %236 {strides = array<i32>} : memref<8x128xf32, #tpu.memory_space<vmem>>, vector<8x128xf32>,
    return
  }
}

</mosaic_0001>

<llo_original>
// kernel: rnn_forward_pallas.1
$region0: #{rnn_forward_pallas.1}
  #allocation0 [shape = 'u32[]', space=smem, size = 0x4, offset = 0x4, fixed_abs, tag = 'smem constant byte address 0x4 - core index']
  #allocation1 [shape = 'u32[144,128]{1,0:T(1,128)}', space=vmem, size = 0x12000, scoped, tag = 'internal scratch']
  %s0 = inlined_call_operand.vmem [shape: f32[8,8,128], index: 0, kind: input, shape index: {}]
  %s1 = inlined_call_operand.vmem [shape: f32[8,8,32], index: 1, kind: input, shape index: {}]
  %s2 = inlined_call_operand.vmem [shape: bf16[32,128], index: 2, kind: input, shape index: {}]
  %s3 = inlined_call_operand.vmem [shape: f32[32,128], index: 3, kind: input, shape index: {}]
  %s4 = inlined_call_operand.vmem [shape: f32[1,128], index: 4, kind: input, shape index: {}]
  %s5 = inlined_call_operand.vmem [shape: f32[8,128], index: 5, kind: output, shape index: {}]
  %s6 = sld [smem:[#allocation0]]
  $region30: #{rnn_forward_pallas.1} parent=0
    _
  %s8 = ssub.s32 1, %s6
  %s9 = scalar_select 0, %s8, %s6
  // Predicated region
  $region2: #{rnn_forward_pallas.1} parent=0 // pred_check
    _
  $region3: #{rnn_forward_pallas.1} parent=0 // pred_check_branch
    %11 = sbr.rel (0) target = $region5
  $region4: #{rnn_forward_pallas.1} parent=0 // pred_region
    _
  $region5: #{rnn_forward_pallas.1} parent=0 // pred_fallthru
    _
  // Predicated region
  $region6: #{rnn_forward_pallas.1} parent=0 // pred_check
    _
  $region7: #{rnn_forward_pallas.1} parent=0 // pred_check_branch
    %13 = sbr.rel (0) target = $region9
  $region8: #{rnn_forward_pallas.1} parent=0 // pred_region
    _
  $region9: #{rnn_forward_pallas.1} parent=0 // pred_fallthru
    _
  // Predicated region
  $region10: #{rnn_forward_pallas.1} parent=0 // pred_check
    _
  $region11: #{rnn_forward_pallas.1} parent=0 // pred_check_branch
    %15 = sbr.rel (0) target = $region13
  $region12: #{rnn_forward_pallas.1} parent=0 // pred_region
    _
  $region13: #{rnn_forward_pallas.1} parent=0 // pred_fallthru
    _
  // Predicated region
  $region14: #{rnn_forward_pallas.1} parent=0 // pred_check
    _
  $region15: #{rnn_forward_pallas.1} parent=0 // pred_check_branch
    %17 = sbr.rel (0) target = $region17
  $region16: #{rnn_forward_pallas.1} parent=0 // pred_region
    _
  $region17: #{rnn_forward_pallas.1} parent=0 // pred_fallthru
    _
  // Predicated region
  $region18: #{rnn_forward_pallas.1} parent=0 // pred_check
    _
  $region19: #{rnn_forward_pallas.1} parent=0 // pred_check_branch
    %19 = sbr.rel (0) target = $region21
  $region20: #{rnn_forward_pallas.1} parent=0 // pred_region
    _
  $region21: #{rnn_forward_pallas.1} parent=0 // pred_fallthru
    _
  %v21 = vld [vmem:[%s2] sm:$0xf]
  %v22 = vld [vmem:[%s2 + $0x4] sm:$0xf]
  %v23 = vld [vmem:[%s2 + $0x8] sm:$0xf]
  %v24 = vld [vmem:[%s2 + $0xc] sm:$0xf]
  %v25 = vld [vmem:[%s0] sm:$0xff]
  %v30 = vunpack.c.l.b16 %v21
  %v31 = vunpack.c.l.b16 %v22
  %v32 = vunpack.c.l.b16 %v23
  %v33 = vunpack.c.l.b16 %v24
  %v34 = vpack.c.b16 %v31, %v30
  %v35 = vpack.c.b16 %v33, %v32
  %vm38 = vcmask 261120
  %v40 = vsel %vm38, 0, 0
  %42 = vmatprep.subr.bf16.mxu0 0
  %43 = vmatpush1.bf16.msra.mxu0 %v34
  %44 = vmatprep.subr.bf16.mxu0 0
  %45 = vmatpush1.bf16.msra.mxu0 %v35
  %46 = vmatprep.subr.bf16.mxu0 0
  %47 = vmatpush1.bf16.msra.mxu0 0
  %48 = vmatprep.subr.bf16.mxu0 0
  %49 = vmatpush1.bf16.msra.mxu0 0
  %50 = vmatprep.subr.bf16.mxu0 0
  %51 = vmatpush1.bf16.msra.mxu0 0
  %52 = vmatprep.subr.bf16.mxu0 0
  %53 = vmatpush1.bf16.msra.mxu0 0
  %54 = vmatprep.subr.bf16.mxu0 0
  %55 = vmatpush1.bf16.msra.mxu0 0
  %56 = vmatprep.subr.bf16.mxu0 0
  %57 = vmatpush1.bf16.msra.mxu0 0
  %58 = vmatprep.subr.bf16.mxu0 0
  %59 = vmatpush1.bf16.msra.mxu0 0
  %60 = vmatprep.subr.bf16.mxu0 0
  %61 = vmatpush1.bf16.msra.mxu0 0
  %62 = vmatprep.subr.bf16.mxu0 0
  %63 = vmatpush1.bf16.msra.mxu0 0
  %64 = vmatprep.subr.bf16.mxu0 0
  %65 = vmatpush1.bf16.msra.mxu0 0
  %66 = vmatprep.subr.bf16.mxu0 0
  %67 = vmatpush1.bf16.msra.mxu0 0
  %68 = vmatprep.subr.bf16.mxu0 0
  %69 = vmatpush1.bf16.msra.mxu0 0
  %70 = vmatprep.subr.bf16.mxu0 0
  %71 = vmatpush1.bf16.msra.mxu0 0
  %72 = vmatprep.subr.bf16.mxu0 0
  %73 = vmatpush1.bf16.msra.mxu0 0
  %74 = vmatprep.mubr.bf16.mxu0 0
  %75 = vmatmul.mubr.bf16.gmra.mrb[0].mxu0 %v40
  %v76 = vpop.f32.mrb[0].mxu0
  %v77 = vadd.f32 0.0, %v76
  %v78 = vpop.f32.mrb[0].mxu0
  %v79 = vpop.f32.mrb[0].mxu0
  %v80 = vpop.f32.mrb[0].mxu0
  %81 = vdwg.mxu0
  %v82 = vadd.f32 %v25, %v77
  %v83 = vxor.u32 %v82, 2147483648
  %v84 = vmul.f32 %v83, 1.442695
  %v85 = vpow.pop %v84
  %v86 = vadd.f32 %v85, 1.0
  %v87 = vrcp.pop %v86
  %v88 = vmul.f32 1.0, %v87
  %v89 = vtanh.pop %v82
  %v90 = vmul.f32 %v88, 0.0
  %92 = vrot.lane.b32.xlu0 %v89, 32
  %v93 = vpop.permute.xlu0 %92
  %v95 = vmul.f32 %v88, %v93
  %97 = vrot.lane.b32.xlu0 %v95, 32
  %v98 = vpop.permute.xlu0 %97
  %v100 = vadd.f32 %v90, %v98
  %v101 = vtanh.pop %v100
  %103 = vrot.lane.b32.xlu0 %v101, 32
  %v104 = vpop.permute.xlu0 %103
  %v106 = vmul.f32 %v88, %v104
  %v107 = vld [vmem:[%s1] sm:$0xff]
  %vm108 = vcmp.gt.f32.partialorder %v107, 0.5
  %110 = vrot.lane.b32.xlu0 %v106, 64
  %v111 = vpop.permute.xlu0 %110
  %v113 = vsel %vm108, %v111, 0.0
  %115 = vrot.lane.b32.xlu0 %v100, 96
  %v116 = vpop.permute.xlu0 %115
  %v118 = vsel %vm108, %v116, 0.0
  %s119 = scalar_lea.vmem %s0, 8
  %v120 = vld [vmem:[%s119] sm:$0xff]
  %v121 = vpack.c.bf16 %v113, %v113
  %v123 = vsel %vm38, %v121, 0
  %125 = vmatprep.subr.bf16.mxu0 0
  %126 = vmatpush1.bf16.msra.mxu0 %v34
  %127 = vmatprep.subr.bf16.mxu0 0
  %128 = vmatpush1.bf16.msra.mxu0 %v35
  %129 = vmatprep.subr.bf16.mxu0 0
  %130 = vmatpush1.bf16.msra.mxu0 0
  %131 = vmatprep.subr.bf16.mxu0 0
  %132 = vmatpush1.bf16.msra.mxu0 0
  %133 = vmatprep.subr.bf16.mxu0 0
  %134 = vmatpush1.bf16.msra.mxu0 0
  %135 = vmatprep.subr.bf16.mxu0 0
  %136 = vmatpush1.bf16.msra.mxu0 0
  %137 = vmatprep.subr.bf16.mxu0 0
  %138 = vmatpush1.bf16.msra.mxu0 0
  %139 = vmatprep.subr.bf16.mxu0 0
  %140 = vmatpush1.bf16.msra.mxu0 0
  %141 = vmatprep.subr.bf16.mxu0 0
  %142 = vmatpush1.bf16.msra.mxu0 0
  %143 = vmatprep.subr.bf16.mxu0 0
  %144 = vmatpush1.bf16.msra.mxu0 0
  %145 = vmatprep.subr.bf16.mxu0 0
  %146 = vmatpush1.bf16.msra.mxu0 0
  %147 = vmatprep.subr.bf16.mxu0 0
  %148 = vmatpush1.bf16.msra.mxu0 0
  %149 = vmatprep.subr.bf16.mxu0 0
  %150 = vmatpush1.bf16.msra.mxu0 0
  %151 = vmatprep.subr.bf16.mxu0 0
  %152 = vmatpush1.bf16.msra.mxu0 0
  %153 = vmatprep.subr.bf16.mxu0 0
  %154 = vmatpush1.bf16.msra.mxu0 0
  %155 = vmatprep.subr.bf16.mxu0 0
  %156 = vmatpush1.bf16.msra.mxu0 0
  %157 = vmatprep.mubr.bf16.mxu0 0
  %158 = vmatmul.mubr.bf16.gmra.mrb[0].mxu0 %v123
  %v159 = vpop.f32.mrb[0].mxu0
  %v160 = vadd.f32 0.0, %v159
  %v161 = vpop.f32.mrb[0].mxu0
  %v162 = vpop.f32.mrb[0].mxu0
  %v163 = vpop.f32.mrb[0].mxu0
  %164 = vdwg.mxu0
  %v165 = vadd.f32 %v120, %v160
  %v166 = vxor.u32 %v165, 2147483648
  %v167 = vmul.f32 %v166, 1.442695
  %v168 = vpow.pop %v167
  %v169 = vadd.f32 %v168, 1.0
  %v170 = vrcp.pop %v169
  %v171 = vmul.f32 1.0, %v170
  %v172 = vtanh.pop %v165
  %174 = vrot.lane.b32.xlu0 %v118, 32
  %v175 = vpop.permute.xlu0 %174
  %v177 = vmul.f32 %v171, %v175
  %179 = vrot.lane.b32.xlu0 %v172, 32
  %v180 = vpop.permute.xlu0 %179
  %v182 = vmul.f32 %v171, %v180
  %184 = vrot.lane.b32.xlu0 %v182, 32
  %v185 = vpop.permute.xlu0 %184
  %v187 = vadd.f32 %v177, %v185
  %v188 = vtanh.pop %v187
  %190 = vrot.lane.b32.xlu0 %v188, 32
  %v191 = vpop.permute.xlu0 %190
  %v193 = vmul.f32 %v171, %v191
  %s194 = scalar_lea.vmem %s1, 8
  %v195 = vld [vmem:[%s194] sm:$0xff]
  %vm196 = vcmp.gt.f32.partialorder %v195, 0.5
  %198 = vrot.lane.b32.xlu0 %v193, 64
  %v199 = vpop.permute.xlu0 %198
  %v201 = vsel %vm196, %v199, %v113
  %203 = vrot.lane.b32.xlu0 %v187, 96
  %v204 = vpop.permute.xlu0 %203
  %v206 = vsel %vm196, %v204, %v118
  %s207 = scalar_lea.vmem %s0, 16
  %v208 = vld [vmem:[%s207] sm:$0xff]
  %v209 = vpack.c.bf16 %v201, %v201
  %v211 = vsel %vm38, %v209, 0
  %213 = vmatprep.subr.bf16.mxu0 0
  %214 = vmatpush1.bf16.msra.mxu0 %v34
  %215 = vmatprep.subr.bf16.mxu0 0
  %216 = vmatpush1.bf16.msra.mxu0 %v35
  %217 = vmatprep.subr.bf16.mxu0 0
  %218 = vmatpush1.bf16.msra.mxu0 0
  %219 = vmatprep.subr.bf16.mxu0 0
  %220 = vmatpush1.bf16.msra.mxu0 0
  %221 = vmatprep.subr.bf16.mxu0 0
  %222 = vmatpush1.bf16.msra.mxu0 0
  %223 = vmatprep.subr.bf16.mxu0 0
  %224 = vmatpush1.bf16.msra.mxu0 0
  %225 = vmatprep.subr.bf16.mxu0 0
  %226 = vmatpush1.bf16.msra.mxu0 0
  %227 = vmatprep.subr.bf16.mxu0 0
  %228 = vmatpush1.bf16.msra.mxu0 0
  %229 = vmatprep.subr.bf16.mxu0 0
  %230 = vmatpush1.bf16.msra.mxu0 0
  %231 = vmatprep.subr.bf16.mxu0 0
  %232 = vmatpush1.bf16.msra.mxu0 0
  %233 = vmatprep.subr.bf16.mxu0 0
  %234 = vmatpush1.bf16.msra.mxu0 0
  %235 = vmatprep.subr.bf16.mxu0 0
  %236 = vmatpush1.bf16.msra.mxu0 0
  %237 = vmatprep.subr.bf16.mxu0 0
  %238 = vmatpush1.bf16.msra.mxu0 0
  %239 = vmatprep.subr.bf16.mxu0 0
  %240 = vmatpush1.bf16.msra.mxu0 0
  %241 = vmatprep.subr.bf16.mxu0 0
  %242 = vmatpush1.bf16.msra.mxu0 0
  %243 = vmatprep.subr.bf16.mxu0 0
  %244 = vmatpush1.bf16.msra.mxu0 0
  %245 = vmatprep.mubr.bf16.mxu0 0
  %246 = vmatmul.mubr.bf16.gmra.mrb[0].mxu0 %v211
  %v247 = vpop.f32.mrb[0].mxu0
  %v248 = vadd.f32 0.0, %v247
  %v249 = vpop.f32.mrb[0].mxu0
  %v250 = vpop.f32.mrb[0].mxu0
  %v251 = vpop.f32.mrb[0].mxu0
  %252 = vdwg.mxu0
  %v253 = vadd.f32 %v208, %v248
  %v254 = vxor.u32 %v253, 2147483648
  %v255 = vmul.f32 %v254, 1.442695
  %v256 = vpow.pop %v255
  %v257 = vadd.f32 %v256, 1.0
  %v258 = vrcp.pop %v257
  %v259 = vmul.f32 1.0, %v258
  %v260 = vtanh.pop %v253
  %262 = vrot.lane.b32.xlu0 %v206, 32
  %v263 = vpop.permute.xlu0 %262
  %v265 = vmul.f32 %v259, %v263
  %267 = vrot.lane.b32.xlu0 %v260, 32
  %v268 = vpop.permute.xlu0 %267
  %v270 = vmul.f32 %v259, %v268
  %272 = vrot.lane.b32.xlu0 %v270, 32
  %v273 = vpop.permute.xlu0 %272
  %v275 = vadd.f32 %v265, %v273
  %v276 = vtanh.pop %v275
  %278 = vrot.lane.b32.xlu0 %v276, 32
  %v279 = vpop.permute.xlu0 %278
  %v281 = vmul.f32 %v259, %v279
  %s282 = scalar_lea.vmem %s1, 16
  %v283 = vld [vmem:[%s282] sm:$0xff]
  %vm284 = vcmp.gt.f32.partialorder %v283, 0.5
  %286 = vrot.lane.b32.xlu0 %v281, 64
  %v287 = vpop.permute.xlu0 %286
  %v289 = vsel %vm284, %v287, %v201
  %291 = vrot.lane.b32.xlu0 %v275, 96
  %v292 = vpop.permute.xlu0 %291
  %v294 = vsel %vm284, %v292, %v206
  %s295 = scalar_lea.vmem %s0, 24
  %v296 = vld [vmem:[%s295] sm:$0xff]
  %v297 = vpack.c.bf16 %v289, %v289
  %v299 = vsel %vm38, %v297, 0
  %301 = vmatprep.subr.bf16.mxu0 0
  %302 = vmatpush1.bf16.msra.mxu0 %v34
  %303 = vmatprep.subr.bf16.mxu0 0
  %304 = vmatpush1.bf16.msra.mxu0 %v35
  %305 = vmatprep.subr.bf16.mxu0 0
  %306 = vmatpush1.bf16.msra.mxu0 0
  %307 = vmatprep.subr.bf16.mxu0 0
  %308 = vmatpush1.bf16.msra.mxu0 0
  %309 = vmatprep.subr.bf16.mxu0 0
  %310 = vmatpush1.bf16.msra.mxu0 0
  %311 = vmatprep.subr.bf16.mxu0 0
  %312 = vmatpush1.bf16.msra.mxu0 0
  %313 = vmatprep.subr.bf16.mxu0 0
  %314 = vmatpush1.bf16.msra.mxu0 0
  %315 = vmatprep.subr.bf16.mxu0 0
  %316 = vmatpush1.bf16.msra.mxu0 0
  %317 = vmatprep.subr.bf16.mxu0 0
  %318 = vmatpush1.bf16.msra.mxu0 0
  %319 = vmatprep.subr.bf16.mxu0 0
  %320 = vmatpush1.bf16.msra.mxu0 0
  %321 = vmatprep.subr.bf16.mxu0 0
  %322 = vmatpush1.bf16.msra.mxu0 0
  %323 = vmatprep.subr.bf16.mxu0 0
  %324 = vmatpush1.bf16.msra.mxu0 0
  %325 = vmatprep.subr.bf16.mxu0 0
  %326 = vmatpush1.bf16.msra.mxu0 0
  %327 = vmatprep.subr.bf16.mxu0 0
  %328 = vmatpush1.bf16.msra.mxu0 0
  %329 = vmatprep.subr.bf16.mxu0 0
  %330 = vmatpush1.bf16.msra.mxu0 0
  %331 = vmatprep.subr.bf16.mxu0 0
  %332 = vmatpush1.bf16.msra.mxu0 0
  %333 = vmatprep.mubr.bf16.mxu0 0
  %334 = vmatmul.mubr.bf16.gmra.mrb[0].mxu0 %v299
  %v335 = vpop.f32.mrb[0].mxu0
  %v336 = vadd.f32 0.0, %v335
  %v337 = vpop.f32.mrb[0].mxu0
  %v338 = vpop.f32.mrb[0].mxu0
  %v339 = vpop.f32.mrb[0].mxu0
  %340 = vdwg.mxu0
  %v341 = vadd.f32 %v296, %v336
  %v342 = vxor.u32 %v341, 2147483648
  %v343 = vmul.f32 %v342, 1.442695
  %v344 = vpow.pop %v343
  %v345 = vadd.f32 %v344, 1.0
  %v346 = vrcp.pop %v345
  %v347 = vmul.f32 1.0, %v346
  %v348 = vtanh.pop %v341
  %350 = vrot.lane.b32.xlu0 %v294, 32
  %v351 = vpop.permute.xlu0 %350
  %v353 = vmul.f32 %v347, %v351
  %355 = vrot.lane.b32.xlu0 %v348, 32
  %v356 = vpop.permute.xlu0 %355
  %v358 = vmul.f32 %v347, %v356
  %360 = vrot.lane.b32.xlu0 %v358, 32
  %v361 = vpop.permute.xlu0 %360
  %v363 = vadd.f32 %v353, %v361
  %v364 = vtanh.pop %v363
  %366 = vrot.lane.b32.xlu0 %v364, 32
  %v367 = vpop.permute.xlu0 %366
  %v369 = vmul.f32 %v347, %v367
  %s370 = scalar_lea.vmem %s1, 24
  %v371 = vld [vmem:[%s370] sm:$0xff]
  %vm372 = vcmp.gt.f32.partialorder %v371, 0.5
  %374 = vrot.lane.b32.xlu0 %v369, 64
  %v375 = vpop.permute.xlu0 %374
  %v377 = vsel %vm372, %v375, %v289
  %379 = vrot.lane.b32.xlu0 %v363, 96
  %v380 = vpop.permute.xlu0 %379
  %v382 = vsel %vm372, %v380, %v294
  %s383 = scalar_lea.vmem %s0, 32
  %v384 = vld [vmem:[%s383] sm:$0xff]
  %v385 = vpack.c.bf16 %v377, %v377
  %v387 = vsel %vm38, %v385, 0
  %389 = vmatprep.subr.bf16.mxu0 0
  %390 = vmatpush1.bf16.msra.mxu0 %v34
  %391 = vmatprep.subr.bf16.mxu0 0
  %392 = vmatpush1.bf16.msra.mxu0 %v35
  %393 = vmatprep.subr.bf16.mxu0 0
  %394 = vmatpush1.bf16.msra.mxu0 0
  %395 = vmatprep.subr.bf16.mxu0 0
  %396 = vmatpush1.bf16.msra.mxu0 0
  %397 = vmatprep.subr.bf16.mxu0 0
  %398 = vmatpush1.bf16.msra.mxu0 0
  %399 = vmatprep.subr.bf16.mxu0 0
  %400 = vmatpush1.bf16.msra.mxu0 0
  %401 = vmatprep.subr.bf16.mxu0 0
  %402 = vmatpush1.bf16.msra.mxu0 0
  %403 = vmatprep.subr.bf16.mxu0 0
  %404 = vmatpush1.bf16.msra.mxu0 0
  %405 = vmatprep.subr.bf16.mxu0 0
  %406 = vmatpush1.bf16.msra.mxu0 0
  %407 = vmatprep.subr.bf16.mxu0 0
  %408 = vmatpush1.bf16.msra.mxu0 0
  %409 = vmatprep.subr.bf16.mxu0 0
  %410 = vmatpush1.bf16.msra.mxu0 0
  %411 = vmatprep.subr.bf16.mxu0 0
  %412 = vmatpush1.bf16.msra.mxu0 0
  %413 = vmatprep.subr.bf16.mxu0 0
  %414 = vmatpush1.bf16.msra.mxu0 0
  %415 = vmatprep.subr.bf16.mxu0 0
  %416 = vmatpush1.bf16.msra.mxu0 0
  %417 = vmatprep.subr.bf16.mxu0 0
  %418 = vmatpush1.bf16.msra.mxu0 0
  %419 = vmatprep.subr.bf16.mxu0 0
  %420 = vmatpush1.bf16.msra.mxu0 0
  %421 = vmatprep.mubr.bf16.mxu0 0
  %422 = vmatmul.mubr.bf16.gmra.mrb[0].mxu0 %v387
  %v423 = vpop.f32.mrb[0].mxu0
  %v424 = vadd.f32 0.0, %v423
  %v425 = vpop.f32.mrb[0].mxu0
  %v426 = vpop.f32.mrb[0].mxu0
  %v427 = vpop.f32.mrb[0].mxu0
  %428 = vdwg.mxu0
  %v429 = vadd.f32 %v384, %v424
  %v430 = vxor.u32 %v429, 2147483648
  %v431 = vmul.f32 %v430, 1.442695
  %v432 = vpow.pop %v431
  %v433 = vadd.f32 %v432, 1.0
  %v434 = vrcp.pop %v433
  %v435 = vmul.f32 1.0, %v434
  %v436 = vtanh.pop %v429
  %438 = vrot.lane.b32.xlu0 %v382, 32
  %v439 = vpop.permute.xlu0 %438
  %v441 = vmul.f32 %v435, %v439
  %443 = vrot.lane.b32.xlu0 %v436, 32
  %v444 = vpop.permute.xlu0 %443
  %v446 = vmul.f32 %v435, %v444
  %448 = vrot.lane.b32.xlu0 %v446, 32
  %v449 = vpop.permute.xlu0 %448
  %v451 = vadd.f32 %v441, %v449
  %v452 = vtanh.pop %v451
  %454 = vrot.lane.b32.xlu0 %v452, 32
  %v455 = vpop.permute.xlu0 %454
  %v457 = vmul.f32 %v435, %v455
  %s458 = scalar_lea.vmem %s1, 32
  %v459 = vld [vmem:[%s458] sm:$0xff]
  %vm460 = vcmp.gt.f32.partialorder %v459, 0.5
  %462 = vrot.lane.b32.xlu0 %v457, 64
  %v463 = vpop.permute.xlu0 %462
  %v465 = vsel %vm460, %v463, %v377
  %467 = vrot.lane.b32.xlu0 %v451, 96
  %v468 = vpop.permute.xlu0 %467
  %v470 = vsel %vm460, %v468, %v382
  %s471 = scalar_lea.vmem %s0, 40
  %v472 = vld [vmem:[%s471] sm:$0xff]
  %v473 = vpack.c.bf16 %v465, %v465
  %v475 = vsel %vm38, %v473, 0
  %477 = vmatprep.subr.bf16.mxu0 0
  %478 = vmatpush1.bf16.msra.mxu0 %v34
  %479 = vmatprep.subr.bf16.mxu0 0
  %480 = vmatpush1.bf16.msra.mxu0 %v35
  %481 = vmatprep.subr.bf16.mxu0 0
  %482 = vmatpush1.bf16.msra.mxu0 0
  %483 = vmatprep.subr.bf16.mxu0 0
  %484 = vmatpush1.bf16.msra.mxu0 0
  %485 = vmatprep.subr.bf16.mxu0 0
  %486 = vmatpush1.bf16.msra.mxu0 0
  %487 = vmatprep.subr.bf16.mxu0 0
  %488 = vmatpush1.bf16.msra.mxu0 0
  %489 = vmatprep.subr.bf16.mxu0 0
  %490 = vmatpush1.bf16.msra.mxu0 0
  %491 = vmatprep.subr.bf16.mxu0 0
  %492 = vmatpush1.bf16.msra.mxu0 0
  %493 = vmatprep.subr.bf16.mxu0 0
  %494 = vmatpush1.bf16.msra.mxu0 0
  %495 = vmatprep.subr.bf16.mxu0 0
  %496 = vmatpush1.bf16.msra.mxu0 0
  %497 = vmatprep.subr.bf16.mxu0 0
  %498 = vmatpush1.bf16.msra.mxu0 0
  %499 = vmatprep.subr.bf16.mxu0 0
  %500 = vmatpush1.bf16.msra.mxu0 0
  %501 = vmatprep.subr.bf16.mxu0 0
  %502 = vmatpush1.bf16.msra.mxu0 0
  %503 = vmatprep.subr.bf16.mxu0 0
  %504 = vmatpush1.bf16.msra.mxu0 0
  %505 = vmatprep.subr.bf16.mxu0 0
  %506 = vmatpush1.bf16.msra.mxu0 0
  %507 = vmatprep.subr.bf16.mxu0 0
  %508 = vmatpush1.bf16.msra.mxu0 0
  %509 = vmatprep.mubr.bf16.mxu0 0
  %510 = vmatmul.mubr.bf16.gmra.mrb[0].mxu0 %v475
  %v511 = vpop.f32.mrb[0].mxu0
  %v512 = vadd.f32 0.0, %v511
  %v513 = vpop.f32.mrb[0].mxu0
  %v514 = vpop.f32.mrb[0].mxu0
  %v515 = vpop.f32.mrb[0].mxu0
  %516 = vdwg.mxu0
  %v517 = vadd.f32 %v472, %v512
  %v518 = vxor.u32 %v517, 2147483648
  %v519 = vmul.f32 %v518, 1.442695
  %v520 = vpow.pop %v519
  %v521 = vadd.f32 %v520, 1.0
  %v522 = vrcp.pop %v521
  %v523 = vmul.f32 1.0, %v522
  %v524 = vtanh.pop %v517
  %526 = vrot.lane.b32.xlu0 %v470, 32
  %v527 = vpop.permute.xlu0 %526
  %v529 = vmul.f32 %v523, %v527
  %531 = vrot.lane.b32.xlu0 %v524, 32
  %v532 = vpop.permute.xlu0 %531
  %v534 = vmul.f32 %v523, %v532
  %536 = vrot.lane.b32.xlu0 %v534, 32
  %v537 = vpop.permute.xlu0 %536
  %v539 = vadd.f32 %v529, %v537
  %v540 = vtanh.pop %v539
  %542 = vrot.lane.b32.xlu0 %v540, 32
  %v543 = vpop.permute.xlu0 %542
  %v545 = vmul.f32 %v523, %v543
  %s546 = scalar_lea.vmem %s1, 40
  %v547 = vld [vmem:[%s546] sm:$0xff]
  %vm548 = vcmp.gt.f32.partialorder %v547, 0.5
  %550 = vrot.lane.b32.xlu0 %v545, 64
  %v551 = vpop.permute.xlu0 %550
  %v553 = vsel %vm548, %v551, %v465
  %555 = vrot.lane.b32.xlu0 %v539, 96
  %v556 = vpop.permute.xlu0 %555
  %v558 = vsel %vm548, %v556, %v470
  %s559 = scalar_lea.vmem %s0, 48
  %v560 = vld [vmem:[%s559] sm:$0xff]
  %v561 = vpack.c.bf16 %v553, %v553
  %v563 = vsel %vm38, %v561, 0
  %565 = vmatprep.subr.bf16.mxu0 0
  %566 = vmatpush1.bf16.msra.mxu0 %v34
  %567 = vmatprep.subr.bf16.mxu0 0
  %568 = vmatpush1.bf16.msra.mxu0 %v35
  %569 = vmatprep.subr.bf16.mxu0 0
  %570 = vmatpush1.bf16.msra.mxu0 0
  %571 = vmatprep.subr.bf16.mxu0 0
  %572 = vmatpush1.bf16.msra.mxu0 0
  %573 = vmatprep.subr.bf16.mxu0 0
  %574 = vmatpush1.bf16.msra.mxu0 0
  %575 = vmatprep.subr.bf16.mxu0 0
  %576 = vmatpush1.bf16.msra.mxu0 0
  %577 = vmatprep.subr.bf16.mxu0 0
  %578 = vmatpush1.bf16.msra.mxu0 0
  %579 = vmatprep.subr.bf16.mxu0 0
  %580 = vmatpush1.bf16.msra.mxu0 0
  %581 = vmatprep.subr.bf16.mxu0 0
  %582 = vmatpush1.bf16.msra.mxu0 0
  %583 = vmatprep.subr.bf16.mxu0 0
  %584 = vmatpush1.bf16.msra.mxu0 0
  %585 = vmatprep.subr.bf16.mxu0 0
  %586 = vmatpush1.bf16.msra.mxu0 0
  %587 = vmatprep.subr.bf16.mxu0 0
  %588 = vmatpush1.bf16.msra.mxu0 0
  %589 = vmatprep.subr.bf16.mxu0 0
  %590 = vmatpush1.bf16.msra.mxu0 0
  %591 = vmatprep.subr.bf16.mxu0 0
  %592 = vmatpush1.bf16.msra.mxu0 0
  %593 = vmatprep.subr.bf16.mxu0 0
  %594 = vmatpush1.bf16.msra.mxu0 0
  %595 = vmatprep.subr.bf16.mxu0 0
  %596 = vmatpush1.bf16.msra.mxu0 0
  %597 = vmatprep.mubr.bf16.mxu0 0
  %598 = vmatmul.mubr.bf16.gmra.mrb[0].mxu0 %v563
  %v599 = vpop.f32.mrb[0].mxu0
  %v600 = vadd.f32 0.0, %v599
  %v601 = vpop.f32.mrb[0].mxu0
  %v602 = vpop.f32.mrb[0].mxu0
  %v603 = vpop.f32.mrb[0].mxu0
  %604 = vdwg.mxu0
  %v605 = vadd.f32 %v560, %v600
  %v606 = vxor.u32 %v605, 2147483648
  %v607 = vmul.f32 %v606, 1.442695
  %v608 = vpow.pop %v607
  %v609 = vadd.f32 %v608, 1.0
  %v610 = vrcp.pop %v609
  %v611 = vmul.f32 1.0, %v610
  %v612 = vtanh.pop %v605
  %614 = vrot.lane.b32.xlu0 %v558, 32
  %v615 = vpop.permute.xlu0 %614
  %v617 = vmul.f32 %v611, %v615
  %619 = vrot.lane.b32.xlu0 %v612, 32
  %v620 = vpop.permute.xlu0 %619
  %v622 = vmul.f32 %v611, %v620
  %624 = vrot.lane.b32.xlu0 %v622, 32
  %v625 = vpop.permute.xlu0 %624
  %v627 = vadd.f32 %v617, %v625
  %v628 = vtanh.pop %v627
  %630 = vrot.lane.b32.xlu0 %v628, 32
  %v631 = vpop.permute.xlu0 %630
  %v633 = vmul.f32 %v611, %v631
  %s634 = scalar_lea.vmem %s1, 48
  %v635 = vld [vmem:[%s634] sm:$0xff]
  %vm636 = vcmp.gt.f32.partialorder %v635, 0.5
  %638 = vrot.lane.b32.xlu0 %v633, 64
  %v639 = vpop.permute.xlu0 %638
  %v641 = vsel %vm636, %v639, %v553
  %643 = vrot.lane.b32.xlu0 %v627, 96
  %v644 = vpop.permute.xlu0 %643
  %v646 = vsel %vm636, %v644, %v558
  %s647 = scalar_lea.vmem %s0, 56
  %v648 = vld [vmem:[%s647] sm:$0xff]
  %v649 = vpack.c.bf16 %v641, %v641
  %v651 = vsel %vm38, %v649, 0
  %653 = vmatprep.subr.bf16.mxu0 0
  %654 = vmatpush1.bf16.msra.mxu0 %v34
  %655 = vmatprep.subr.bf16.mxu0 0
  %656 = vmatpush1.bf16.msra.mxu0 %v35
  %657 = vmatprep.subr.bf16.mxu0 0
  %658 = vmatpush1.bf16.msra.mxu0 0
  %659 = vmatprep.subr.bf16.mxu0 0
  %660 = vmatpush1.bf16.msra.mxu0 0
  %661 = vmatprep.subr.bf16.mxu0 0
  %662 = vmatpush1.bf16.msra.mxu0 0
  %663 = vmatprep.subr.bf16.mxu0 0
  %664 = vmatpush1.bf16.msra.mxu0 0
  %665 = vmatprep.subr.bf16.mxu0 0
  %666 = vmatpush1.bf16.msra.mxu0 0
  %667 = vmatprep.subr.bf16.mxu0 0
  %668 = vmatpush1.bf16.msra.mxu0 0
  %669 = vmatprep.subr.bf16.mxu0 0
  %670 = vmatpush1.bf16.msra.mxu0 0
  %671 = vmatprep.subr.bf16.mxu0 0
  %672 = vmatpush1.bf16.msra.mxu0 0
  %673 = vmatprep.subr.bf16.mxu0 0
  %674 = vmatpush1.bf16.msra.mxu0 0
  %675 = vmatprep.subr.bf16.mxu0 0
  %676 = vmatpush1.bf16.msra.mxu0 0
  %677 = vmatprep.subr.bf16.mxu0 0
  %678 = vmatpush1.bf16.msra.mxu0 0
  %679 = vmatprep.subr.bf16.mxu0 0
  %680 = vmatpush1.bf16.msra.mxu0 0
  %681 = vmatprep.subr.bf16.mxu0 0
  %682 = vmatpush1.bf16.msra.mxu0 0
  %683 = vmatprep.subr.bf16.mxu0 0
  %684 = vmatpush1.bf16.msra.mxu0 0
  %685 = vmatprep.mubr.bf16.mxu0 0
  %686 = vmatmul.mubr.bf16.gmra.mrb[0].mxu0 %v651
  %v687 = vpop.f32.mrb[0].mxu0
  %v688 = vadd.f32 0.0, %v687
  %v689 = vpop.f32.mrb[0].mxu0
  %v690 = vpop.f32.mrb[0].mxu0
  %v691 = vpop.f32.mrb[0].mxu0
  %692 = vdwg.mxu0
  %v693 = vadd.f32 %v648, %v688
  %v694 = vxor.u32 %v693, 2147483648
  %v695 = vmul.f32 %v694, 1.442695
  %v696 = vpow.pop %v695
  %v697 = vadd.f32 %v696, 1.0
  %v698 = vrcp.pop %v697
  %v699 = vmul.f32 1.0, %v698
  %v700 = vtanh.pop %v693
  %702 = vrot.lane.b32.xlu0 %v646, 32
  %v703 = vpop.permute.xlu0 %702
  %v705 = vmul.f32 %v699, %v703
  %707 = vrot.lane.b32.xlu0 %v700, 32
  %v708 = vpop.permute.xlu0 %707
  %v710 = vmul.f32 %v699, %v708
  %712 = vrot.lane.b32.xlu0 %v710, 32
  %v713 = vpop.permute.xlu0 %712
  %v715 = vadd.f32 %v705, %v713
  %v716 = vtanh.pop %v715
  %718 = vrot.lane.b32.xlu0 %v716, 32
  %v719 = vpop.permute.xlu0 %718
  %v721 = vmul.f32 %v699, %v719
  %s722 = scalar_lea.vmem %s1, 56
  %v723 = vld [vmem:[%s722] sm:$0xff]
  %vm724 = vcmp.gt.f32.partialorder %v723, 0.5
  %726 = vrot.lane.b32.xlu0 %v721, 64
  %v727 = vpop.permute.xlu0 %726
  %v729 = vsel %vm724, %v727, %v641
  %v730 = vld [vmem:[%s3] sm:$0xff]
  %v731 = vld [vmem:[%s3 + $0x8] sm:$0xff]
  %v732 = vld [vmem:[%s3 + $0x10] sm:$0xff]
  %v733 = vld [vmem:[%s3 + $0x18] sm:$0xff]
  %v734 = vld [vmem:[%s4] sm:$0x1]
  %v736 = vlaneseq
  %v737 = vshrl.u32 %v736, 7
  %v738 = vsub.s32 0, %v737
  %v739 = vrot.slane %v734, %v738
  %v742 = vsel %vm38, %v729, 0
  %744 = vmatprep.subr.mxu0 0.0
  %745 = vmatpush1.msra.mxu0 %v730
  %746 = vmatprep.subr.mxu0 0.0
  %747 = vmatpush1.msra.mxu0 %v731
  %748 = vmatprep.subr.mxu0 0.0
  %749 = vmatpush1.msra.mxu0 %v732
  %750 = vmatprep.subr.mxu0 0.0
  %751 = vmatpush1.msra.mxu0 %v733
  %752 = vmatprep.subr.mxu0 0.0
  %753 = vmatpush1.msra.mxu0 0.0
  %754 = vmatprep.subr.mxu0 0.0
  %755 = vmatpush1.msra.mxu0 0.0
  %756 = vmatprep.subr.mxu0 0.0
  %757 = vmatpush1.msra.mxu0 0.0
  %758 = vmatprep.subr.mxu0 0.0
  %759 = vmatpush1.msra.mxu0 0.0
  %760 = vmatprep.subr.mxu0 0.0
  %761 = vmatpush1.msra.mxu0 0.0
  %762 = vmatprep.subr.mxu0 0.0
  %763 = vmatpush1.msra.mxu0 0.0
  %764 = vmatprep.subr.mxu0 0.0
  %765 = vmatpush1.msra.mxu0 0.0
  %766 = vmatprep.subr.mxu0 0.0
  %767 = vmatpush1.msra.mxu0 0.0
  %768 = vmatprep.subr.mxu0 0.0
  %769 = vmatpush1.msra.mxu0 0.0
  %770 = vmatprep.subr.mxu0 0.0
  %771 = vmatpush1.msra.mxu0 0.0
  %772 = vmatprep.subr.mxu0 0.0
  %773 = vmatpush1.msra.mxu0 0.0
  %774 = vmatprep.subr.mxu0 0.0
  %775 = vmatpush1.msra.mxu0 0.0
  %776 = vmatprep.subr.mxu0 0.0
  %777 = vmatpush1.msra.mxu0 0.0
  %778 = vmatprep.subr.mxu0 0.0
  %779 = vmatpush1.msra.mxu0 0.0
  %780 = vmatprep.subr.mxu0 0.0
  %781 = vmatpush1.msra.mxu0 0.0
  %782 = vmatprep.subr.mxu0 0.0
  %783 = vmatpush1.msra.mxu0 0.0
  %784 = vmatprep.subr.mxu0 0.0
  %785 = vmatpush1.msra.mxu0 0.0
  %786 = vmatprep.subr.mxu0 0.0
  %787 = vmatpush1.msra.mxu0 0.0
  %788 = vmatprep.subr.mxu0 0.0
  %789 = vmatpush1.msra.mxu0 0.0
  %790 = vmatprep.subr.mxu0 0.0
  %791 = vmatpush1.msra.mxu0 0.0
  %792 = vmatprep.subr.mxu0 0.0
  %793 = vmatpush1.msra.mxu0 0.0
  %794 = vmatprep.subr.mxu0 0.0
  %795 = vmatpush1.msra.mxu0 0.0
  %796 = vmatprep.subr.mxu0 0.0
  %797 = vmatpush1.msra.mxu0 0.0
  %798 = vmatprep.subr.mxu0 0.0
  %799 = vmatpush1.msra.mxu0 0.0
  %800 = vmatprep.subr.mxu0 0.0
  %801 = vmatpush1.msra.mxu0 0.0
  %802 = vmatprep.subr.mxu0 0.0
  %803 = vmatpush1.msra.mxu0 0.0
  %804 = vmatprep.subr.mxu0 0.0
  %805 = vmatpush1.msra.mxu0 0.0
  %806 = vmatprep.subr.mxu0 0.0
  %807 = vmatpush1.msra.mxu0 0.0
  %808 = vmatprep.mubr.f32.mxu0 0.0
  %809 = vmatmul.mubr.f32.gmra.mrb[0].mxu0 %v742
  %v810 = vpop.f32.mrb[0].mxu0
  %v811 = vadd.f32 %v739, %v810
  %v812 = vpop.f32.mrb[0].mxu0
  %813 = vdwg.mxu0
  %814 = vst [vmem:[%s5] sm:$0xff] %v811
  // Predicated region
  $region22: #{rnn_forward_pallas.1} parent=0 // pred_check
    _
  $region23: #{rnn_forward_pallas.1} parent=0 // pred_check_branch
    %816 = sbr.rel (0) target = $region25
  $region24: #{rnn_forward_pallas.1} parent=0 // pred_region
    _
  $region25: #{rnn_forward_pallas.1} parent=0 // pred_fallthru
    _
  // Predicated region
  $region26: #{rnn_forward_pallas.1} parent=0 // pred_check
    _
  $region27: #{rnn_forward_pallas.1} parent=0 // pred_check_branch
    %818 = sbr.rel (0) target = $region29
  $region28: #{rnn_forward_pallas.1} parent=0 // pred_region
    _
  $region29: #{rnn_forward_pallas.1} parent=0 // pred_fallthru
    _

</llo_original>
